<compile_context>
chip_gen: v7x
topology: tpu7x:2x2x1
jax: 0.10.0
libtpu: 0.0.40
codegen_flags: <defaults>
</compile_context>

<pallas_src>
import functools

import jax
import jax.numpy as jnp
from jax.experimental import pallas as pl
from jax.experimental.pallas import tpu as pltpu


def _rup(a, b):
    return -(-a // b) * b


def _ds(start, size, stride):
    return pl.ds(start, size, stride=stride) if stride > 1 else pl.ds(start, size)


def _vmem_budget():
    """Returns (per-step footprint budget, scoped vmem limit, physical VMEM)."""
    cap = None
    try:
        cap = getattr(pltpu.get_tpu_info(), "vmem_capacity_bytes", None)
    except Exception:
        cap = None
    if not cap:
        cap = 64 * 1024 * 1024                    # conservative fallback: v7x physical VMEM
    budget = min(max(cap // 4, 8 * 1024 * 1024), 32 * 1024 * 1024)   # v7x: 16 MiB, v5e/v6e: 32 MiB
    limit = min(max(2 * budget, 32 * 1024 * 1024), cap - cap // 8)   # v7x: 32 MiB, v5e/v6e: 64 MiB
    return budget, limit, cap


# ----------------------------------------------------------------------------
# Path A: channels on lanes (W < 128).  x_ref: (oh_blk, k, W, tn) -> o_ref:
# (oh_blk, OW, tn).  The lane axis (fused batch*channel) is untouched.
# ----------------------------------------------------------------------------
def _pool_kernel_lanes(x_ref, o_ref, *, k):
    ow = o_ref.shape[1]
    # Pool along W: k sublane-strided ref loads folded with VPU maxima.
    # TODO(synk): for packed sub-32-bit dtypes (bf16/int8) verify via
    # pl.lower_as_mlir that stride-k sublane loads don't trigger relayouts.
    wmax = x_ref[:, :, _ds(0, ow, k), :]
    for j in range(1, k):
        wmax = jnp.maximum(wmax, x_ref[:, :, _ds(j, ow, k), :])
    # Pool along H: reduce the (leading) kernel-row axis the wrapper split out.
    o_ref[...] = wmax.max(axis=1).astype(o_ref.dtype)


def _choose_tiles_lanes(N, H, W, k, itemsize, budget):
    OH, OW = H // k, W // k

    def fp(oh_blk, tn):
        lanes = _rup(tn, 128)
        return (2 * oh_blk * k * _rup(W, 8) * lanes * itemsize    # input, double-buffered
                + 2 * oh_blk * _rup(OW, 8) * lanes * 4)           # f32 output, double-buffered

    tn = N if N <= 128 else 128
    oh_blk = max(1, min(OH, budget // max(fp(1, tn), 1)))
    if N > 128:
        # Grow the lane tile while it fits and keeps >= 4 grid steps
        # (v7x shards "parallel" grid axes across its 2 TensorCores).
        h_steps = pl.cdiv(OH, oh_blk)
        max_tn = min(_rup(N, 128), 4096)
        while (tn + 128 <= max_tn
               and fp(oh_blk, tn + 128) <= budget
               and pl.cdiv(N, tn + 128) * h_steps >= 4):
            tn += 128
    return oh_blk, tn, fp(oh_blk, tn)


def _max_pool_channels_on_lanes(x, k):
    B, C, H, W = x.shape
    N = B * C
    OH, OW = H // k, W // k
    itemsize = jnp.dtype(x.dtype).itemsize
    budget, vmem_limit, cap = _vmem_budget()
    oh_blk, tn, needed = _choose_tiles_lanes(N, H, W, k, itemsize, budget)
    vmem_limit = int(min(cap, max(vmem_limit, 2 * needed)))

    # Layout plumbing (one cheap XLA pass): (B, C, H, W) -> (OH, k, W, N).
    xr = jnp.moveaxis(x.reshape(N, H, W), 0, 2)[: OH * k]        # (OH*k, W, N)
    xr = xr.reshape(OH, k, W, N)

    out = pl.pallas_call(
        functools.partial(_pool_kernel_lanes, k=k),
        out_shape=jax.ShapeDtypeStruct((OH, OW, N), jnp.float32),
        grid_spec=pltpu.PrefetchScalarGridSpec(
            num_scalar_prefetch=0,
            grid=(pl.cdiv(N, tn), pl.cdiv(OH, oh_blk)),
            # TODO(synk): if traces show exposed DMA at >= 4 steps, sweep
            # pipeline_mode=pl.Buffered(3) on this input spec.
            in_specs=[pl.BlockSpec((oh_blk, k, W, tn), lambda n, h: (h, 0, 0, n))],
            out_specs=pl.BlockSpec((oh_blk, OW, tn), lambda n, h: (h, 0, n)),
        ),
        compiler_params=pltpu.CompilerParams(
            dimension_semantics=("parallel", "parallel"),
            vmem_limit_bytes=vmem_limit,
        ),
    )(xr)
    # Output is only 1/k^2 of the input bytes, so this transpose-back is cheap.
    return jnp.moveaxis(out, 2, 0).reshape(B, C, OH, OW)


# ----------------------------------------------------------------------------
# Path B: spatial on lanes (W >= 128).  x_ref: (tc, th, W) -> o_ref:
# (tc, th//k, OW); s_ref: (tc, W, th//k) transpose scratch.
# ----------------------------------------------------------------------------
def _pool_kernel_spatial(x_ref, o_ref, s_ref, *, k):
    oh = o_ref.shape[1]
    ow = o_ref.shape[2]
    # Stage 1: pool along H via sublane-strided ref loads (VPU maxima).
    hmax = x_ref[:, _ds(0, oh, k), :]
    for i in range(1, k):
        hmax = jnp.maximum(hmax, x_ref[:, _ds(i, oh, k), :])
    # Stage 2: put W on sublanes and pool it the same way.
    # TODO(synk): on v7x consider dropping this VMEM scratch round-trip
    # (in-register swapaxes + strided value slices) after checking the MLIR.
    s_ref[...] = jnp.swapaxes(hmax, 1, 2)                         # (tc, W, oh)
    wmax = s_ref[:, _ds(0, ow, k), :]
    for j in range(1, k):
        wmax = jnp.maximum(wmax, s_ref[:, _ds(j, ow, k), :])
    o_ref[...] = jnp.swapaxes(wmax, 1, 2).astype(o_ref.dtype)


def _choose_tiles_spatial(N, H, W, k, itemsize, budget):
    OW = W // k

    def fp(tc, th):
        oh = max(th // k, 1)
        return (2 * tc * _rup(th, 8) * _rup(W, 128) * itemsize    # input, double-buffered
                + tc * _rup(W, 8) * _rup(oh, 128) * itemsize      # transpose scratch
                + 2 * tc * _rup(oh, 8) * _rup(OW, 128) * 4)       # f32 output, double-buffered

    # H tile: full H if one plane fits, else the largest multiple of 8*k that does.
    th = H
    if fp(1, H) > budget:
        step = 8 * k          # keeps the sublane dim a multiple of 8 and of k
        th = _rup(H, step)
        while th > step and fp(1, th) > budget:
            th -= step
    # Channel tile: as many fused batch*channels as fit, then prefer >= 4 steps.
    tc = max(1, min(N, budget // max(fp(1, th), 1)))
    while tc > 1 and pl.cdiv(N, tc) * pl.cdiv(H, th) < 4:
        tc = max(1, tc // 2)
    return tc, th, fp(tc, th)


def _max_pool_spatial_on_lanes(x, k):
    B, C, H, W = x.shape
    N = B * C
    OH, OW = H // k, W // k
    itemsize = jnp.dtype(x.dtype).itemsize
    budget, vmem_limit, cap = _vmem_budget()
    tc, th, needed = _choose_tiles_spatial(N, H, W, k, itemsize, budget)
    vmem_limit = int(min(cap, max(vmem_limit, 2 * needed)))
    oh_blk = th // k

    xr = x.reshape(N, H, W)
    out = pl.pallas_call(
        functools.partial(_pool_kernel_spatial, k=k),
        out_shape=jax.ShapeDtypeStruct((N, OH, OW), jnp.float32),
        grid_spec=pltpu.PrefetchScalarGridSpec(
            num_scalar_prefetch=0,
            grid=(pl.cdiv(N, tc), pl.cdiv(OH, oh_blk)),
            in_specs=[pl.BlockSpec((tc, th, W), lambda n, h: (n, h, 0))],
            out_specs=pl.BlockSpec((tc, oh_blk, OW), lambda n, h: (n, h, 0)),
            scratch_shapes=[pltpu.VMEM((tc, W, oh_blk), xr.dtype)],
        ),
        compiler_params=pltpu.CompilerParams(
            dimension_semantics=("parallel", "parallel"),
            vmem_limit_bytes=vmem_limit,
        ),
    )(xr)
    return out.reshape(B, C, OH, OW)


# ----------------------------------------------------------------------------
# Public entry point.
# ----------------------------------------------------------------------------
def max_pool_layer(x, kernel_size):
    """Pallas equivalent of MaxPoolLayer.forward.  x: (B, C, H, W) -> f32 (B, C, H//k, W//k)."""
    B, C, H, W = x.shape
    k = int(kernel_size)
    OH, OW = H // k, W // k
    if OH == 0 or OW == 0 or B * C == 0:
        return jnp.zeros((B, C, OH, OW), jnp.float32)
    if W < 128:
        return _max_pool_channels_on_lanes(x, k)   # lane-dense path for narrow feature maps
    return _max_pool_spatial_on_lanes(x, k)        # W already lane-dense


if __name__ == "__main__":
    def ref_pool(x, k):
        B, C, H, W = x.shape
        OH, OW = H // k, W // k
        return (x[:, :, : OH * k, : OW * k]
                .reshape(B, C, OH, k, OW, k)
                .max(axis=(3, 5))
                .astype(jnp.float32))

    # Primary case from the module spec.
    x = jax.random.normal(jax.random.PRNGKey(0), (2, 4, 16, 16), dtype=jnp.float32)
    out = jax.block_until_ready(max_pool_layer(x, 2))
    assert out.shape == (2, 4, 8, 8) and out.dtype == jnp.float32
    assert jnp.allclose(out, ref_pool(x, 2), atol=1e-6), "mismatch (2,4,16,16) k=2"

    # Awkward fused batch*channel count (N=155 -> cdiv grid, partial lane block) and odd k.
    x2 = jax.random.normal(jax.random.PRNGKey(1), (5, 31, 12, 12), dtype=jnp.float32)
    out2 = jax.block_until_ready(max_pool_layer(x2, 3))
    assert jnp.allclose(out2, ref_pool(x2, 3), atol=1e-6), "mismatch (5,31,12,12) k=3"

    # Wide feature map -> spatial-on-lanes fallback path.
    x3 = jax.random.normal(jax.random.PRNGKey(2), (1, 3, 128, 256), dtype=jnp.float32)
    out3 = jax.block_until_ready(max_pool_layer(x3, 2))
    assert jnp.allclose(out3, ref_pool(x3, 2), atol=1e-6), "mismatch (1,3,128,256) k=2"

    print("KERNEL_OK")
</pallas_src>

<mosaic_0001>
module attributes {stable_mosaic.version = 11 : i64} {
  func.func @_pool_kernel_lanes(%arg0: i32, %arg1: i32, %arg2: memref<8x2x16x8xf32, #tpu.memory_space<vmem>>, %arg3: memref<8x8x8xf32, #tpu.memory_space<vmem>>) attributes {dimension_semantics = [#tpu.dimension_semantics<parallel>, #tpu.dimension_semantics<parallel>], iteration_bounds = array<i64: 1, 1>, scalar_prefetch = 0 : i64, scratch_operands = 0 : i64, tpu.core_type = #tpu.core_type<tc>, window_params = [{transform_indices = @transform_0, window_bounds = array<i64: 8, 2, 16, 8>}, {transform_indices = @transform_1, window_bounds = array<i64: 8, 8, 8>}]} {
    %c0 = arith.constant 0 : index
    %c0_0 = arith.constant 0 : index
    %c0_1 = arith.constant 0 : index
    %c0_2 = arith.constant 0 : index
    %0 = tpu.strided_load %arg2[%c0, %c0_0, %c0_1, %c0_2] {strides = array<i32: 1, 1, 2, 1>} : memref<8x2x16x8xf32, #tpu.memory_space<vmem>>, vector<8x2x8x8xf32>
    %c0_3 = arith.constant 0 : index
    %c0_4 = arith.constant 0 : index
    %c1 = arith.constant 1 : index
    %c0_5 = arith.constant 0 : index
    %1 = tpu.strided_load %arg2[%c0_3, %c0_4, %c1, %c0_5] {strides = array<i32: 1, 1, 2, 1>} : memref<8x2x16x8xf32, #tpu.memory_space<vmem>>, vector<8x2x8x8xf32>
    %2 = arith.maximumf %0, %1 : vector<8x2x8x8xf32>
    %cst = arith.constant dense<0xFF800000> : vector<8x8x8xf32>
    %3 = vector.multi_reduction <maximumf>, %2, %cst [1] : vector<8x2x8x8xf32> to vector<8x8x8xf32>
    %c0_6 = arith.constant 0 : index
    %c0_7 = arith.constant 0 : index
    %c0_8 = arith.constant 0 : index
    %4 = vector.load %arg3[%c0_6, %c0_7, %c0_8] : memref<8x8x8xf32, #tpu.memory_space<vmem>>, vector<8x8x8xf32>
    tpu.vector_store %arg3[%c0_6, %c0_7, %c0_8], %3 {strides = array<i32>} : memref<8x8x8xf32, #tpu.memory_space<vmem>>, vector<8x8x8xf32>,
    return
  }
  func.func @transform_0(%arg0: i32, %arg1: i32) -> (i32, i32, i32, i32) {
    %c0_i32 = arith.constant 0 : i32
    %c0_i32_0 = arith.constant 0 : i32
    %c0_i32_1 = arith.constant 0 : i32
    return %arg1, %c0_i32, %c0_i32_0, %arg0 : i32, i32, i32, i32
  }
  func.func @transform_1(%arg0: i32, %arg1: i32) -> (i32, i32, i32) {
    %c0_i32 = arith.constant 0 : i32
    %c0_i32_0 = arith.constant 0 : i32
    return %arg1, %c0_i32, %arg0 : i32, i32, i32
  }
}

</mosaic_0001>

<llo_original>
// kernel: tpu_custom_call.1
$region0: #{tpu_custom_call.1}
  #allocation0 [shape = 'u32[]', space=smem, size = 0x4, offset = 0x4, fixed_abs, tag = 'smem constant byte address 0x4 - core index']
  #allocation1 [shape = 'u32[144,128]{1,0:T(1,128)}', space=vmem, size = 0x12000, scoped, tag = 'internal scratch']
  %s0 = inlined_call_operand.vmem [shape: f32[8,2,16,8], index: 0, kind: input, shape index: {}]
  %s1 = inlined_call_operand.hbm [shape: f32[8,8,8], index: 1, kind: output, shape index: {}]
  %s2 = sld [smem:[#allocation0]]
  $region14: #{tpu_custom_call.1} parent=0
    _
  %s4 = ssub.s32 1, %s2
  %s5 = scalar_select 0, %s4, %s2
  $region1: #{tpu_custom_call.1} parent=0
    #allocation2 [shape = 'u8[32768]{0}', space=vmem, size = 0x8000, scoped, tag = 'output window, operand 0, single buffered']
    #allocation3 [shape = 's32[1]{0}', space=sflag, size = 0x4, scoped, tag = 'scoped memory for tpu_custom_call.1']
    %6 = vsyncpa [#allocation3], 0
    // Predicated region
    $region2: #{tpu_custom_call.1} parent=1 // pred_check
      _
    $region3: #{tpu_custom_call.1} parent=1 // pred_check_branch
      %8 = sbr.rel (0) target = $region5
    $region4: #{tpu_custom_call.1} parent=1 // pred_region
      _
    $region5: #{tpu_custom_call.1} parent=1 // pred_fallthru
      _
    %v9 = vld [vmem:[%s0] ss:$2 sm:$0xff]
    %s10 = scalar_lea.vmem %s0, 16
    %v11 = vld [vmem:[%s10] ss:$2 sm:$0xff]
    %s12 = scalar_lea.vmem %s0, 32
    %v13 = vld [vmem:[%s12] ss:$2 sm:$0xff]
    %s14 = scalar_lea.vmem %s0, 48
    %v15 = vld [vmem:[%s14] ss:$2 sm:$0xff]
    %s16 = scalar_lea.vmem %s0, 64
    %v17 = vld [vmem:[%s16] ss:$2 sm:$0xff]
    %s18 = scalar_lea.vmem %s0, 80
    %v19 = vld [vmem:[%s18] ss:$2 sm:$0xff]
    %s20 = scalar_lea.vmem %s0, 96
    %v21 = vld [vmem:[%s20] ss:$2 sm:$0xff]
    %s22 = scalar_lea.vmem %s0, 112
    %v23 = vld [vmem:[%s22] ss:$2 sm:$0xff]
    %s24 = scalar_lea.vmem %s0, 128
    %v25 = vld [vmem:[%s24] ss:$2 sm:$0xff]
    %s26 = scalar_lea.vmem %s0, 144
    %v27 = vld [vmem:[%s26] ss:$2 sm:$0xff]
    %s28 = scalar_lea.vmem %s0, 160
    %v29 = vld [vmem:[%s28] ss:$2 sm:$0xff]
    %s30 = scalar_lea.vmem %s0, 176
    %v31 = vld [vmem:[%s30] ss:$2 sm:$0xff]
    %s32 = scalar_lea.vmem %s0, 192
    %v33 = vld [vmem:[%s32] ss:$2 sm:$0xff]
    %s34 = scalar_lea.vmem %s0, 208
    %v35 = vld [vmem:[%s34] ss:$2 sm:$0xff]
    %s36 = scalar_lea.vmem %s0, 224
    %v37 = vld [vmem:[%s36] ss:$2 sm:$0xff]
    %s38 = scalar_lea.vmem %s0, 240
    %v39 = vld [vmem:[%s38] ss:$2 sm:$0xff]
    %s40 = scalar_lea.vmem %s0, 1
    %v41 = vld [vmem:[%s40] ss:$2 sm:$0xff]
    %s42 = scalar_lea.vmem %s0, 17
    %v43 = vld [vmem:[%s42] ss:$2 sm:$0xff]
    %s44 = scalar_lea.vmem %s0, 33
    %v45 = vld [vmem:[%s44] ss:$2 sm:$0xff]
    %s46 = scalar_lea.vmem %s0, 49
    %v47 = vld [vmem:[%s46] ss:$2 sm:$0xff]
    %s48 = scalar_lea.vmem %s0, 65
    %v49 = vld [vmem:[%s48] ss:$2 sm:$0xff]
    %s50 = scalar_lea.vmem %s0, 81
    %v51 = vld [vmem:[%s50] ss:$2 sm:$0xff]
    %s52 = scalar_lea.vmem %s0, 97
    %v53 = vld [vmem:[%s52] ss:$2 sm:$0xff]
    %s54 = scalar_lea.vmem %s0, 113
    %v55 = vld [vmem:[%s54] ss:$2 sm:$0xff]
    %s56 = scalar_lea.vmem %s0, 129
    %v57 = vld [vmem:[%s56] ss:$2 sm:$0xff]
    %s58 = scalar_lea.vmem %s0, 145
    %v59 = vld [vmem:[%s58] ss:$2 sm:$0xff]
    %s60 = scalar_lea.vmem %s0, 161
    %v61 = vld [vmem:[%s60] ss:$2 sm:$0xff]
    %s62 = scalar_lea.vmem %s0, 177
    %v63 = vld [vmem:[%s62] ss:$2 sm:$0xff]
    %s64 = scalar_lea.vmem %s0, 193
    %v65 = vld [vmem:[%s64] ss:$2 sm:$0xff]
    %s66 = scalar_lea.vmem %s0, 209
    %v67 = vld [vmem:[%s66] ss:$2 sm:$0xff]
    %s68 = scalar_lea.vmem %s0, 225
    %v69 = vld [vmem:[%s68] ss:$2 sm:$0xff]
    %s70 = scalar_lea.vmem %s0, 241
    %v71 = vld [vmem:[%s70] ss:$2 sm:$0xff]
    %v72 = vmax.f32 %v9, %v41
    %v73 = vmax.f32 %v11, %v43
    %v74 = vmax.f32 %v13, %v45
    %v75 = vmax.f32 %v15, %v47
    %v76 = vmax.f32 %v17, %v49
    %v77 = vmax.f32 %v19, %v51
    %v78 = vmax.f32 %v21, %v53
    %v79 = vmax.f32 %v23, %v55
    %v80 = vmax.f32 %v25, %v57
    %v81 = vmax.f32 %v27, %v59
    %v82 = vmax.f32 %v29, %v61
    %v83 = vmax.f32 %v31, %v63
    %v84 = vmax.f32 %v33, %v65
    %v85 = vmax.f32 %v35, %v67
    %v86 = vmax.f32 %v37, %v69
    %v87 = vmax.f32 %v39, %v71
    %vm88 = vcmask 64512
    %v89 = vsel %vm88, %v72, -inf
    %v90 = vsel %vm88, %v73, -inf
    %v91 = vmax.f32 %v89, %v90
    %v92 = vsel %vm88, %v74, -inf
    %v93 = vsel %vm88, %v75, -inf
    %v94 = vmax.f32 %v92, %v93
    %v95 = vsel %vm88, %v76, -inf
    %v96 = vsel %vm88, %v77, -inf
    %v97 = vmax.f32 %v95, %v96
    %v98 = vsel %vm88, %v78, -inf
    %v99 = vsel %vm88, %v79, -inf
    %v100 = vmax.f32 %v98, %v99
    %v101 = vsel %vm88, %v80, -inf
    %v102 = vsel %vm88, %v81, -inf
    %v103 = vmax.f32 %v101, %v102
    %v104 = vsel %vm88, %v82, -inf
    %v105 = vsel %vm88, %v83, -inf
    %v106 = vmax.f32 %v104, %v105
    %v107 = vsel %vm88, %v84, -inf
    %v108 = vsel %vm88, %v85, -inf
    %v109 = vmax.f32 %v107, %v108
    %v110 = vsel %vm88, %v86, -inf
    %v111 = vsel %vm88, %v87, -inf
    %v112 = vmax.f32 %v110, %v111
    %113 = vst.msk [vmem:[#allocation2] sm:$0xff] %vm88, %v91
    %114 = vst.msk [vmem:[#allocation2 + $0x8] sm:$0xff] %vm88, %v94
    %115 = vst.msk [vmem:[#allocation2 + $0x10] sm:$0xff] %vm88, %v97
    %116 = vst.msk [vmem:[#allocation2 + $0x18] sm:$0xff] %vm88, %v100
    %117 = vst.msk [vmem:[#allocation2 + $0x20] sm:$0xff] %vm88, %v103
    %118 = vst.msk [vmem:[#allocation2 + $0x28] sm:$0xff] %vm88, %v106
    %119 = vst.msk [vmem:[#allocation2 + $0x30] sm:$0xff] %vm88, %v109
    %120 = vst.msk [vmem:[#allocation2 + $0x38] sm:$0xff] %vm88, %v112
    // Predicated region
    $region6: #{tpu_custom_call.1} parent=1 // pred_check
      _
    $region7: #{tpu_custom_call.1} parent=1 // pred_check_branch
      %122 = sbr.rel (0) target = $region9
    $region8: #{tpu_custom_call.1} parent=1 // pred_region
      %s124 = ssub.s32 1024, 1024
      %125 = vsyncadd [#allocation3], %s124
      %s126 = sshll.u32 [#allocation2], 4
      %s127 = int_to_ptr.vmem [resolvable:$true] %s126
      %132 = dma.vmem_to_hbm [thread:$0]  %s127, 1024, %s1, [#allocation3], 128, 128, 8
    $region9: #{tpu_custom_call.1} parent=1 // pred_fallthru
      _
    // Predicated region
    $region10: #{tpu_custom_call.1} parent=1 // pred_check
      _
    $region11: #{tpu_custom_call.1} parent=1 // pred_check_branch
      %134 = sbr.rel (0) target = $region13
    $region12: #{tpu_custom_call.1} parent=1 // pred_region
      %135 = dma.done [#allocation3], 1024
    $region13: #{tpu_custom_call.1} parent=1 // pred_fallthru
      _
    %136 = vsyncpa [#allocation3], 1

</llo_original>
